<compile_context>
chip_gen: v6e
topology: v6e:2x2x1
jax: 0.10.0
libtpu: 0.0.40
codegen_flags: <defaults>
</compile_context>

<pallas_src>
import jax
import jax.numpy as jnp
from jax.experimental import pallas as pl
from jax.experimental.pallas import tpu as pltpu


# ----------------------------- Pallas kernel --------------------------------

def _fused_convnet_kernel(x_ref, wa_ref, ba_ref, wf2_ref, bf2_ref, o_ref):
    """Folded (conv1∘conv2∘fc1) -> ReLU -> fc2 on one lane-dense token tile.

    Feature-major: features on sublanes, tokens on lanes, so both stages are plain
    MXU matmuls and the output store is a full-width `vst`.
    """
    cdt = wa_ref.dtype                                    # compute dtype (bf16 / f32)
    xb = x_ref[0]                                         # (CKK, tile)

    # Folded affine prefix: conv1 + conv2 + fc1 in ONE dot, f32 accumulation.
    h = jnp.dot(wa_ref[...], xb, preferred_element_type=jnp.float32)
    h = jnp.maximum(h + ba_ref[...], 0.0)                 # (HF, tile), f32 epilogue

    # fc2 (single remaining intermediate cast before the MXU).
    y = jnp.dot(wf2_ref[...], h.astype(cdt), preferred_element_type=jnp.float32)
    y = y + bf2_ref[...]                                  # (O, tile), f32

    o_ref[0] = y.astype(o_ref.dtype)                      # lane-dense (O, tile) store


# ----------------------------- wrapper ---------------------------------------

def conv_neural_net_1d_forward(x, params, *, K1, K2, tile=1024,
                               compute_dtype=jnp.bfloat16,
                               out_dtype=jnp.float32,
                               allow_input_fusion=False):
    """Pallas implementation of ConvNeuralNet1D.forward.

    x: (B, dim, L) float32 (PyTorch NCL layout).  params use PyTorch shapes:
      w1 (H, C, K1), b1 (H,), w2 (O, H, K2), b2 (O,),
      wf1 (HF, O), bf1 (HF,), wf2 (O, HF), bf2 (O,).
    Returns (B, O, T2) with T2 = floor((floor((L-K1)/K1)+1 - K2)/K2) + 1.
    """
    B, C, L = x.shape
    w1, b1 = params["w1"], params["b1"]
    w2, b2 = params["w2"], params["b2"]
    wf1, bf1 = params["wf1"], params["bf1"]
    wf2, bf2 = params["wf2"], params["bf2"]
    H, O, HF = w1.shape[0], w2.shape[0], wf1.shape[0]

    T1 = (L - K1) // K1 + 1
    T2 = (T1 - K2) // K2 + 1
    KK = K1 * K2
    CKK = C * KK
    Lu = T2 * KK                                # samples actually consumed

    # ---- token-tile selection (lane-dense, multiple of 128) --------------------
    # Clamp to the padded extent so tiny T2 doesn't over-pad; for B == 1 make sure
    # there are >= 2 grid steps so v7x's two TensorCores both get work.
    t2_128 = pl.cdiv(T2, 128) * 128
    tile = min(max(128, (tile // 128) * 128), t2_128)
    if B == 1 and t2_128 >= 256:
        tile = min(tile, pl.cdiv(T2, 2 * 128) * 128)
    assert tile % 128 == 0
    nT2 = pl.cdiv(T2, tile)
    T2p = nT2 * tile

    # ---- XLA glue: feature-major patches, token axis padded to the tile --------
    # Patch row ordering is (c, k2, k1).
    # TODO(synk): for small-T2 / large-B workloads, fold batch into the lane axis
    # ((CKK, B*T2) slab, 1-D grid) to restore full lane density.
    xp = x[:, :, :Lu].reshape(B, C, T2, K2, K1)
    xp = xp.transpose(0, 1, 3, 4, 2).reshape(B, CKK, T2)
    if T2p != T2:
        xp = jnp.pad(xp, ((0, 0), (0, 0), (0, T2p - T2)))
    xp = xp.astype(compute_dtype)

    # ---- weight folding (tiny, done in f32, cast once at the end) --------------
    # conv1 as block-diagonal (K2*H, C*K2*K1): W[(a,h),(c,b,k)] = w1[h,c,k] * (a==b).
    f32 = jnp.float32
    eye = jnp.eye(K2, dtype=f32)
    w1bd = jnp.einsum("hck,ab->ahcbk", w1.astype(f32), eye).reshape(K2 * H, CKK)
    b1r = jnp.tile(b1.astype(f32), K2).reshape(K2 * H, 1)
    # conv2: rows o, cols (k2, h).
    w2r = w2.transpose(0, 2, 1).reshape(O, K2 * H).astype(f32)
    b2r = b2.reshape(O, 1).astype(f32)
    wf1f = wf1.astype(f32)
    # Affine prefix conv1 -> conv2 -> fc1 folded into one matmul (exact).
    W_a = wf1f @ (w2r @ w1bd)                                   # (HF, CKK)
    b_a = wf1f @ (w2r @ b1r + b2r) + bf1.reshape(HF, 1).astype(f32)
    bf2r = bf2.reshape(O, 1).astype(f32)

    W_a_c = W_a.astype(compute_dtype)
    wf2_c = wf2.astype(compute_dtype)

    # ---- cost hint for the XLA scheduler ----------------------------------------
    in_bytes = B * CKK * T2p * jnp.dtype(compute_dtype).itemsize
    out_bytes = B * O * T2p * jnp.dtype(out_dtype).itemsize
    w_bytes = (HF * CKK + O * HF) * jnp.dtype(compute_dtype).itemsize + (HF + O) * 4
    cost = pl.CostEstimate(
        flops=int(2 * B * T2p * (HF * CKK + O * HF)),
        transcendentals=0,
        bytes_accessed=int(in_bytes + out_bytes + w_bytes),
    )

    const = lambda b, j: (0, 0)
    out = pl.pallas_call(
        _fused_convnet_kernel,
        out_shape=jax.ShapeDtypeStruct((B, O, T2p), out_dtype),
        grid=(B, nT2),
        in_specs=[
            pl.BlockSpec((1, CKK, tile), lambda b, j: (b, 0, j)),   # input patches
            pl.BlockSpec((HF, CKK), const),                         # folded W_a
            pl.BlockSpec((HF, 1), const),                           # folded b_a
            pl.BlockSpec((O, HF), const),                           # fc2 weight
            pl.BlockSpec((O, 1), const),                            # fc2 bias
        ],
        out_specs=pl.BlockSpec((1, O, tile), lambda b, j: (b, 0, j)),
        compiler_params=pltpu.CompilerParams(
            dimension_semantics=("parallel", "parallel"),
            allow_input_fusion=([True, False, False, False, False]
                                if allow_input_fusion else None)),
        cost_estimate=cost,
    )(xp, W_a_c, b_a, wf2_c, bf2r)

    # Already in (B, O, T2p) layout -- just drop the padded tokens.
    return out[:, :, :T2]


# ----------------------------- reference (independent path) -----------------

def reference_forward(x, params, *, K1, K2):
    y = jax.lax.conv_general_dilated(x, params["w1"], window_strides=(K1,),
                                     padding="VALID",
                                     dimension_numbers=("NCH", "OIH", "NCH"))
    y = y + params["b1"][None, :, None]
    y = jax.lax.conv_general_dilated(y, params["w2"], window_strides=(K2,),
                                     padding="VALID",
                                     dimension_numbers=("NCH", "OIH", "NCH"))
    y = y + params["b2"][None, :, None]
    y = jnp.transpose(y, (0, 2, 1))
    y = jnp.maximum(y @ params["wf1"].T + params["bf1"], 0.0)
    y = y @ params["wf2"].T + params["bf2"]
    return jnp.transpose(y, (0, 2, 1))


# ----------------------------- main ------------------------------------------

if __name__ == "__main__":
    # Module hyper-params (PyTorch defaults): Data_shape1=256, n_patch=32.
    dim, hidden_dim, out_dim, hidden_ff = 4, 32, 32, 256
    Data_shape1, n_patch = 256, 32
    K1 = Data_shape1 // n_patch // 2          # 4
    K2 = Data_shape1 // n_patch // 4          # 2  (> 1, so conv2 uses this k/stride)

    key = jax.random.PRNGKey(0)
    ks = jax.random.split(key, 10)
    params = {
        "w1":  0.1 * jax.random.normal(ks[0], (hidden_dim, dim, K1), jnp.float32),
        "b1":  0.1 * jax.random.normal(ks[1], (hidden_dim,), jnp.float32),
        "w2":  0.1 * jax.random.normal(ks[2], (out_dim, hidden_dim, K2), jnp.float32),
        "b2":  0.1 * jax.random.normal(ks[3], (out_dim,), jnp.float32),
        # PyTorch Linear weight shapes: (out_features, in_features)
        "wf1": 0.1 * jax.random.normal(ks[4], (hidden_ff, out_dim), jnp.float32),
        "bf1": 0.1 * jax.random.normal(ks[5], (hidden_ff,), jnp.float32),
        "wf2": 0.1 * jax.random.normal(ks[6], (out_dim, hidden_ff), jnp.float32),
        "bf2": 0.1 * jax.random.normal(ks[7], (out_dim,), jnp.float32),
    }

    fwd = jax.jit(conv_neural_net_1d_forward,
                  static_argnames=("K1", "K2", "tile", "compute_dtype",
                                   "out_dtype", "allow_input_fusion"))

    # Case 1: module-default small shape (B=2, dim=4, L=256 -> T2=32),
    #         default bf16 MXU operands with f32 accumulation; loose check.
    B, L = 2, Data_shape1
    x = jax.random.normal(ks[8], (B, dim, L), jnp.float32)
    out = jax.block_until_ready(fwd(x, params, K1=K1, K2=K2))
    ref = jax.block_until_ready(reference_forward(x, params, K1=K1, K2=K2))
    assert out.shape == ref.shape == (B, out_dim, L // (K1 * K2)), out.shape
    assert jnp.allclose(out, ref, atol=5e-2, rtol=5e-2), float(jnp.abs(out - ref).max())

    # Case 2: same input, f32 compute path -> verifies the affine weight folding
    #         (conv1∘conv2∘fc1) is exact, tight tolerance.
    out2 = jax.block_until_ready(
        fwd(x, params, K1=K1, K2=K2, compute_dtype=jnp.float32))
    assert jnp.allclose(out2, ref, atol=1e-4, rtol=1e-4), float(jnp.abs(out2 - ref).max())

    # Case 3: ragged length (L not a multiple of K1*K2) -> exercises input truncation
    #         and padding/slicing of the token-tile tail; f32 compute, tight check.
    B3, L3 = 2, 310
    x3 = jax.random.normal(jax.random.PRNGKey(1), (B3, dim, L3), jnp.float32)
    out3 = jax.block_until_ready(
        fwd(x3, params, K1=K1, K2=K2, compute_dtype=jnp.float32))
    ref3 = jax.block_until_ready(reference_forward(x3, params, K1=K1, K2=K2))
    assert out3.shape == ref3.shape, (out3.shape, ref3.shape)
    assert jnp.allclose(out3, ref3, atol=1e-4, rtol=1e-4), float(jnp.abs(out3 - ref3).max())

    # Case 4: B=1 with T2=256 -> tile auto-shrinks so the grid has 2 steps
    #         (dual-TensorCore friendly) and the multi-tile path is exercised.
    B4, L4 = 1, 2048
    x4 = jax.random.normal(jax.random.PRNGKey(2), (B4, dim, L4), jnp.float32)
    out4 = jax.block_until_ready(
        fwd(x4, params, K1=K1, K2=K2, compute_dtype=jnp.float32))
    ref4 = jax.block_until_ready(reference_forward(x4, params, K1=K1, K2=K2))
    assert out4.shape == ref4.shape == (B4, out_dim, L4 // (K1 * K2))
    assert jnp.allclose(out4, ref4, atol=1e-4, rtol=1e-4), float(jnp.abs(out4 - ref4).max())

    print("KERNEL_OK")
</pallas_src>

<mosaic_0001>
module attributes {stable_mosaic.version = 11 : i64} {
  func.func @_fused_convnet_kernel(%arg0: i32, %arg1: i32, %arg2: memref<1x32x128xbf16, #tpu.memory_space<vmem>>, %arg3: memref<256x32xbf16, #tpu.memory_space<vmem>>, %arg4: memref<256x1xf32, #tpu.memory_space<vmem>>, %arg5: memref<32x256xbf16, #tpu.memory_space<vmem>>, %arg6: memref<32x1xf32, #tpu.memory_space<vmem>>, %arg7: memref<1x32x128xf32, #tpu.memory_space<vmem>>) attributes {dimension_semantics = [#tpu.dimension_semantics<parallel>, #tpu.dimension_semantics<parallel>], iteration_bounds = array<i64: 2, 1>, scalar_prefetch = 0 : i64, scratch_operands = 0 : i64, tpu.core_type = #tpu.core_type<tc>, window_params = [{transform_indices = @transform_0, window_bounds = array<i64: 1, 32, 128>}, {pipeline_mode = #tpu.pipeline_mode<synchronous>, transform_indices = @transform_1, window_bounds = array<i64: 256, 32>}, {pipeline_mode = #tpu.pipeline_mode<synchronous>, transform_indices = @transform_2, window_bounds = array<i64: 256, 1>}, {pipeline_mode = #tpu.pipeline_mode<synchronous>, transform_indices = @transform_3, window_bounds = array<i64: 32, 256>}, {pipeline_mode = #tpu.pipeline_mode<synchronous>, transform_indices = @transform_4, window_bounds = array<i64: 32, 1>}, {transform_indices = @transform_5, window_bounds = array<i64: 1, 32, 128>}]} {
    %c0 = arith.constant 0 : index
    %c0_0 = arith.constant 0 : index
    %c0_1 = arith.constant 0 : index
    %0 = vector.load %arg2[%c0, %c0_0, %c0_1] : memref<1x32x128xbf16, #tpu.memory_space<vmem>>, vector<1x32x128xbf16>
    %1 = vector.shape_cast %0 : vector<1x32x128xbf16> to vector<32x128xbf16>
    %c0_2 = arith.constant 0 : index
    %c0_3 = arith.constant 0 : index
    %2 = vector.load %arg3[%c0_2, %c0_3] : memref<256x32xbf16, #tpu.memory_space<vmem>>, vector<256x32xbf16>
    %cst = arith.constant dense<0.000000e+00> : vector<256x128xf32>
    %3 = tpu.matmul %2, %1, %cst {dimension_numbers = #tpu.dot_dimension_numbers<[1], [0], [0], [1], [0, 0, 1, 1], [], []>} : vector<256x32xbf16>, vector<32x128xbf16>, vector<256x128xf32> -> vector<256x128xf32>
    %c0_4 = arith.constant 0 : index
    %c0_5 = arith.constant 0 : index
    %4 = vector.load %arg4[%c0_4, %c0_5] : memref<256x1xf32, #tpu.memory_space<vmem>>, vector<256x1xf32>
    %5 = vector.broadcast %4 : vector<256x1xf32> to vector<256x128xf32>
    %6 = arith.addf %3, %5 : vector<256x128xf32>
    %cst_6 = arith.constant 0.000000e+00 : f32
    %7 = vector.broadcast %cst_6 : f32 to vector<256x128xf32>
    %8 = arith.maximumf %6, %7 : vector<256x128xf32>
    %c0_7 = arith.constant 0 : index
    %c0_8 = arith.constant 0 : index
    %9 = vector.load %arg5[%c0_7, %c0_8] : memref<32x256xbf16, #tpu.memory_space<vmem>>, vector<32x256xbf16>
    %10 = arith.truncf %8 : vector<256x128xf32> to vector<256x128xbf16>
    %cst_9 = arith.constant dense<0.000000e+00> : vector<32x128xf32>
    %11 = tpu.matmul %9, %10, %cst_9 {dimension_numbers = #tpu.dot_dimension_numbers<[1], [0], [0], [1], [0, 0, 1, 1], [], []>} : vector<32x256xbf16>, vector<256x128xbf16>, vector<32x128xf32> -> vector<32x128xf32>
    %c0_10 = arith.constant 0 : index
    %c0_11 = arith.constant 0 : index
    %12 = vector.load %arg6[%c0_10, %c0_11] : memref<32x1xf32, #tpu.memory_space<vmem>>, vector<32x1xf32>
    %13 = vector.broadcast %12 : vector<32x1xf32> to vector<32x128xf32>
    %14 = arith.addf %11, %13 : vector<32x128xf32>
    %c0_12 = arith.constant 0 : index
    %c0_13 = arith.constant 0 : index
    %c0_14 = arith.constant 0 : index
    %15 = vector.load %arg7[%c0_12, %c0_13, %c0_14] : memref<1x32x128xf32, #tpu.memory_space<vmem>>, vector<1x32x128xf32>
    %16 = vector.shape_cast %15 : vector<1x32x128xf32> to vector<32x128xf32>
    %17 = vector.shape_cast %14 : vector<32x128xf32> to vector<1x32x128xf32>
    tpu.vector_store %arg7[%c0_12, %c0_13, %c0_14], %17 {strides = array<i32>} : memref<1x32x128xf32, #tpu.memory_space<vmem>>, vector<1x32x128xf32>,
    return
  }
  func.func @transform_0(%arg0: i32, %arg1: i32) -> (i32, i32, i32) {
    %c0_i32 = arith.constant 0 : i32
    %c0_i32_0 = arith.constant 0 : i32
    return %arg0, %c0_i32, %arg1 : i32, i32, i32
  }
  func.func @transform_1(%arg0: i32, %arg1: i32) -> (i32, i32) {
    %c0_i32 = arith.constant 0 : i32
    %c0_i32_0 = arith.constant 0 : i32
    %c0_i32_1 = arith.constant 0 : i32
    return %c0_i32, %c0_i32_0 : i32, i32
  }
  func.func @transform_2(%arg0: i32, %arg1: i32) -> (i32, i32) {
    %c0_i32 = arith.constant 0 : i32
    %c0_i32_0 = arith.constant 0 : i32
    %c0_i32_1 = arith.constant 0 : i32
    return %c0_i32, %c0_i32_0 : i32, i32
  }
  func.func @transform_3(%arg0: i32, %arg1: i32) -> (i32, i32) {
    %c0_i32 = arith.constant 0 : i32
    %c0_i32_0 = arith.constant 0 : i32
    %c0_i32_1 = arith.constant 0 : i32
    return %c0_i32, %c0_i32_0 : i32, i32
  }
  func.func @transform_4(%arg0: i32, %arg1: i32) -> (i32, i32) {
    %c0_i32 = arith.constant 0 : i32
    %c0_i32_0 = arith.constant 0 : i32
    %c0_i32_1 = arith.constant 0 : i32
    return %c0_i32, %c0_i32_0 : i32, i32
  }
  func.func @transform_5(%arg0: i32, %arg1: i32) -> (i32, i32, i32) {
    %c0_i32 = arith.constant 0 : i32
    %c0_i32_0 = arith.constant 0 : i32
    return %arg0, %c0_i32, %arg1 : i32, i32, i32
  }
}

</mosaic_0001>

<llo_original>
// kernel: conv_neural_net_1d_forward.1
$region0: #{conv_neural_net_1d_forward.1}
  #allocation0 [shape = 'u32[]', space=smem, size = 0x4, offset = 0x4, fixed_abs, tag = 'smem constant byte address 0x4 - core index']
  #allocation1 [shape = 'u32[144,128]{1,0:T(1,128)}', space=vmem, size = 0x12000, scoped, tag = 'internal scratch']
  %s0 = inlined_call_operand.vmem [shape: bf16[2,32,128], index: 0, kind: input, shape index: {}]
  %s1 = inlined_call_operand.vmem [shape: bf16[256,32], index: 1, kind: input, shape index: {}]
  %s2 = inlined_call_operand.vmem [shape: f32[256,1], index: 2, kind: input, shape index: {}]
  %s3 = inlined_call_operand.vmem [shape: bf16[32,256], index: 3, kind: input, shape index: {}]
  %s4 = inlined_call_operand.vmem [shape: f32[32,1], index: 4, kind: input, shape index: {}]
  %s5 = inlined_call_operand.hbm [shape: f32[2,32,128], index: 5, kind: output, shape index: {}]
  %s6 = sld [smem:[#allocation0]]
  $region53: #{conv_neural_net_1d_forward.1} parent=0
    _
  %s8 = ssub.s32 1, %s6
  %s9 = scalar_select 0, %s8, %s6
  $region1: #{conv_neural_net_1d_forward.1} parent=0
    #allocation2 [shape = 'u8[32768]{0}', space=vmem, size = 0x8000, scoped, tag = 'output window, operand 0']
    #allocation3 [shape = 's32[2]{0}', space=sflag, size = 0x8, scoped, tag = 'scoped memory for conv_neural_net_1d_forward.1']
    %10 = vsyncpa [#allocation3], 0
    %s11 = scalar_lea.sflag [#allocation3], 1
    %12 = vsyncpa %s11, 0
    loop: start=0, step=1, limit=4
    $region2: #{conv_neural_net_1d_forward.1} parent=1 // loop_pre_header
      _
    $region3: #{conv_neural_net_1d_forward.1} parent=1 // loop_header
      %s14 = sphi 0, %s18
      %p15 = scmp.ge.s32.totalorder %s14, 4
      %s21 = sphi 0, %s33
      %s22 = sphi 0, %s29
      %s23 = sphi 0, %s21
      %s24 = sphi 0, %s22
      %s25 = sphi 0, %s23
      %s26 = sphi 0, %s24
      %s38 = sphi 0, %s40
      %s41 = sphi 0, %s38
      %s42 = sphi 0, %s41
      %s58 = sphi 0, %s42
      %s62 = sphi 0, %s62
      %s64 = sphi 0, %s62
      %s65 = sphi 0, %s64
      %s79 = sphi 0, %s65
      %s83 = sphi 0, %s83
      %s85 = sphi 0, %s83
      %s86 = sphi 0, %s85
      %s100 = sphi 0, %s86
      %s104 = sphi 0, %s104
      %s106 = sphi 0, %s104
      %s107 = sphi 0, %s106
      %s121 = sphi 0, %s107
      %s125 = sphi 0, %s125
      %s127 = sphi 0, %s125
      %s128 = sphi 0, %s127
      %s142 = sphi 0, %s128
      %s150 = sphi 0, %s152
      %s153 = sphi 0, %s150
      %s154 = sphi 0, %s153
      %s170 = sphi 0, %s154
    $region4: #{conv_neural_net_1d_forward.1} parent=1 // loop_header_branch
      %17 = sbr.rel (%p15) target = $region8
    $region5: #{conv_neural_net_1d_forward.1} parent=1 // loop_body
      %s19 = ssub.s32 %s14, 1
      %s20 = ssub.s32 %s14, 2
      %s27 = sadd.s32 1, %s22
      %p28 = scmp.ge.s32.totalorder %s27, 1
      %s29 = scalar_select %p28, 0, %s27
      %s30 = sadd.s32 1, %s21
      %s31 = scalar_select %p28, %s30, %s21
      %p32 = scmp.ge.s32.totalorder %s31, 2
      %s33 = scalar_select %p32, 0, %s31
      %s34 = ssub.s32 %s21, %s33
      %s35 = ssub.s32 %s22, %s29
      %s36 = sor.u32 %s34, %s35
      %p37 = scmp.eq.s32.totalorder %s36, 0
      %s39 = sadd.s32 %s38, 1
      %s40 = scalar_select %p37, %s38, %s39
      %p43 = pneg %p37
      %p44 = scmp.eq.s32.totalorder %s14, 1
      %p45 = por %p43, %p44
      %p46 = scmp.ne.s32.totalorder %s38, %s41
      %p47 = scmp.eq.s32.totalorder %s14, 0
      %p48 = por %p46, %p47
      %p49 = scmp.ne.s32.totalorder %s38, %s41
      %p50 = scmp.eq.s32.totalorder %s19, 1
      %p51 = por %p49, %p50
      %p52 = scmp.ne.s32.totalorder %s41, %s42
      %p53 = scmp.eq.s32.totalorder %s19, 0
      %p54 = por %p52, %p53
      %p55 = scmp.ne.s32.totalorder %s41, %s42
      %p56 = scmp.eq.s32.totalorder %s20, 1
      %p57 = por %p55, %p56
      %p59 = scmp.ne.s32.totalorder %s42, %s58
      %p60 = scmp.eq.s32.totalorder %s20, 0
      %p61 = por %p59, %p60
      %s63 = sadd.s32 %s62, 1
      %p66 = scmp.eq.s32.totalorder %s14, 1
      %p67 = scmp.ne.s32.totalorder %s62, %s64
      %p68 = scmp.eq.s32.totalorder %s14, 0
      %p69 = por %p67, %p68
      %p70 = scmp.ne.s32.totalorder %s62, %s64
      %p71 = scmp.eq.s32.totalorder %s19, 1
      %p72 = por %p70, %p71
      %p73 = scmp.ne.s32.totalorder %s64, %s65
      %p74 = scmp.eq.s32.totalorder %s19, 0
      %p75 = por %p73, %p74
      %p76 = scmp.ne.s32.totalorder %s64, %s65
      %p77 = scmp.eq.s32.totalorder %s20, 1
      %p78 = por %p76, %p77
      %p80 = scmp.ne.s32.totalorder %s65, %s79
      %p81 = scmp.eq.s32.totalorder %s20, 0
      %p82 = por %p80, %p81
      %s84 = sadd.s32 %s83, 1
      %p87 = scmp.eq.s32.totalorder %s14, 1
      %p88 = scmp.ne.s32.totalorder %s83, %s85
      %p89 = scmp.eq.s32.totalorder %s14, 0
      %p90 = por %p88, %p89
      %p91 = scmp.ne.s32.totalorder %s83, %s85
      %p92 = scmp.eq.s32.totalorder %s19, 1
      %p93 = por %p91, %p92
      %p94 = scmp.ne.s32.totalorder %s85, %s86
      %p95 = scmp.eq.s32.totalorder %s19, 0
      %p96 = por %p94, %p95
      %p97 = scmp.ne.s32.totalorder %s85, %s86
      %p98 = scmp.eq.s32.totalorder %s20, 1
      %p99 = por %p97, %p98
      %p101 = scmp.ne.s32.totalorder %s86, %s100
      %p102 = scmp.eq.s32.totalorder %s20, 0
      %p103 = por %p101, %p102
      %s105 = sadd.s32 %s104, 1
      %p108 = scmp.eq.s32.totalorder %s14, 1
      %p109 = scmp.ne.s32.totalorder %s104, %s106
      %p110 = scmp.eq.s32.totalorder %s14, 0
      %p111 = por %p109, %p110
      %p112 = scmp.ne.s32.totalorder %s104, %s106
      %p113 = scmp.eq.s32.totalorder %s19, 1
      %p114 = por %p112, %p113
      %p115 = scmp.ne.s32.totalorder %s106, %s107
      %p116 = scmp.eq.s32.totalorder %s19, 0
      %p117 = por %p115, %p116
      %p118 = scmp.ne.s32.totalorder %s106, %s107
      %p119 = scmp.eq.s32.totalorder %s20, 1
      %p120 = por %p118, %p119
      %p122 = scmp.ne.s32.totalorder %s107, %s121
      %p123 = scmp.eq.s32.totalorder %s20, 0
      %p124 = por %p122, %p123
      %s126 = sadd.s32 %s125, 1
      %p129 = scmp.eq.s32.totalorder %s14, 1
      %p130 = scmp.ne.s32.totalorder %s125, %s127
      %p131 = scmp.eq.s32.totalorder %s14, 0
      %p132 = por %p130, %p131
      %p133 = scmp.ne.s32.totalorder %s125, %s127
      %p134 = scmp.eq.s32.totalorder %s19, 1
      %p135 = por %p133, %p134
      %p136 = scmp.ne.s32.totalorder %s127, %s128
      %p137 = scmp.eq.s32.totalorder %s19, 0
      %p138 = por %p136, %p137
      %p139 = scmp.ne.s32.totalorder %s127, %s128
      %p140 = scmp.eq.s32.totalorder %s20, 1
      %p141 = por %p139, %p140
      %p143 = scmp.ne.s32.totalorder %s128, %s142
      %p144 = scmp.eq.s32.totalorder %s20, 0
      %p145 = por %p143, %p144
      %s146 = ssub.s32 %s21, %s33
      %s147 = ssub.s32 %s22, %s29
      %s148 = sor.u32 %s146, %s147
      %p149 = scmp.eq.s32.totalorder %s148, 0
      %s151 = sadd.s32 %s150, 1
      %s152 = scalar_select %p149, %s150, %s151
      %p155 = pneg %p149
      %p156 = scmp.eq.s32.totalorder %s14, 1
      %p157 = por %p155, %p156
      %p158 = scmp.ne.s32.totalorder %s150, %s153
      %p159 = scmp.eq.s32.totalorder %s14, 0
      %p160 = por %p158, %p159
      %p161 = scmp.ne.s32.totalorder %s150, %s153
      %p162 = scmp.eq.s32.totalorder %s19, 1
      %p163 = por %p161, %p162
      %p164 = scmp.ne.s32.totalorder %s153, %s154
      %p165 = scmp.eq.s32.totalorder %s19, 0
      %p166 = por %p164, %p165
      %p167 = scmp.ne.s32.totalorder %s153, %s154
      %p168 = scmp.eq.s32.totalorder %s20, 1
      %p169 = por %p167, %p168
      %p171 = scmp.ne.s32.totalorder %s154, %s170
      %p172 = scmp.eq.s32.totalorder %s20, 0
      %p173 = por %p171, %p172
      %p174 = scmp.le.s32.totalorder 1, %s14
      %p175 = scmp.lt.s32.totalorder %s14, 3
      %p176 = pnand %p174, %p175
      %p177 = pneg %p176
      // Predicated region
      $region9: #{conv_neural_net_1d_forward.1} parent=5 // pred_check
        _
      $region10: #{conv_neural_net_1d_forward.1} parent=5 // pred_check_branch
        %179 = sbr.rel (%p176) target = $region12
      $region11: #{conv_neural_net_1d_forward.1} parent=5 // pred_region
        %s180 = ssub.s32 %s14, 1
        // Predicated region
        $region13: #{conv_neural_net_1d_forward.1} parent=11 // pred_check
          %p181 = pneg %p75
        $region14: #{conv_neural_net_1d_forward.1} parent=11 // pred_check_branch
          %183 = sbr.rel (%p181) target = $region16
        $region15: #{conv_neural_net_1d_forward.1} parent=11 // pred_region
          _
        $region16: #{conv_neural_net_1d_forward.1} parent=11 // pred_fallthru
          _
        // Predicated region
        $region17: #{conv_neural_net_1d_forward.1} parent=11 // pred_check
          %p184 = pneg %p96
        $region18: #{conv_neural_net_1d_forward.1} parent=11 // pred_check_branch
          %186 = sbr.rel (%p184) target = $region20
        $region19: #{conv_neural_net_1d_forward.1} parent=11 // pred_region
          _
        $region20: #{conv_neural_net_1d_forward.1} parent=11 // pred_fallthru
          _
        // Predicated region
        $region21: #{conv_neural_net_1d_forward.1} parent=11 // pred_check
          %p187 = pneg %p117
        $region22: #{conv_neural_net_1d_forward.1} parent=11 // pred_check_branch
          %189 = sbr.rel (%p187) target = $region24
        $region23: #{conv_neural_net_1d_forward.1} parent=11 // pred_region
          _
        $region24: #{conv_neural_net_1d_forward.1} parent=11 // pred_fallthru
          _
        // Predicated region
        $region25: #{conv_neural_net_1d_forward.1} parent=11 // pred_check
          %p190 = pneg %p138
        $region26: #{conv_neural_net_1d_forward.1} parent=11 // pred_check_branch
          %192 = sbr.rel (%p190) target = $region28
        $region27: #{conv_neural_net_1d_forward.1} parent=11 // pred_region
          _
        $region28: #{conv_neural_net_1d_forward.1} parent=11 // pred_fallthru
          _
      $region12: #{conv_neural_net_1d_forward.1} parent=5 // pred_fallthru
        _
      %p193 = scmp.lt.s32.totalorder %s14, 2
      // Predicated region
      $region29: #{conv_neural_net_1d_forward.1} parent=5 // pred_check
        %p194 = pneg %p193
      $region30: #{conv_neural_net_1d_forward.1} parent=5 // pred_check_branch
        %196 = sbr.rel (%p194) target = $region32
      $region31: #{conv_neural_net_1d_forward.1} parent=5 // pred_region
        // Predicated region
        $region33: #{conv_neural_net_1d_forward.1} parent=31 // pred_check
          %p197 = pneg %p48
        $region34: #{conv_neural_net_1d_forward.1} parent=31 // pred_check_branch
          %199 = sbr.rel (%p197) target = $region36
        $region35: #{conv_neural_net_1d_forward.1} parent=31 // pred_region
          %p200 = scmp.lt.s32.totalorder %s21, 1
          %s201 = scalar_select %p200, %s21, 1
          %p202 = scmp.lt.s32.totalorder %s22, 0
          %s203 = scalar_select %p202, %s22, 0
          %s204 = smul.addr %s201, 4
          %s205 = sadd.s32 %s203, %s204
          %s206 = smul.addr %s205, 4
          %s207 = scalar_lea.vmem %s0, %s206
        $region36: #{conv_neural_net_1d_forward.1} parent=31 // pred_fallthru
          _
      $region32: #{conv_neural_net_1d_forward.1} parent=5 // pred_fallthru
        _
      %p208 = scmp.le.s32.totalorder 1, %s14
      %p209 = scmp.lt.s32.totalorder %s14, 3
      %p210 = pnand %p208, %p209
      %p211 = pneg %p210
      // Predicated region
      $region37: #{conv_neural_net_1d_forward.1} parent=5 // pred_check
        _
      $region38: #{conv_neural_net_1d_forward.1} parent=5 // pred_check_branch
        %213 = sbr.rel (%p210) target = $region40
      $region39: #{conv_neural_net_1d_forward.1} parent=5 // pred_region
        %s214 = ssub.s32 %s14, 1
        %p215 = scmp.lt.s32.totalorder %s23, 1
        %s216 = scalar_select %p215, %s23, 1
        %p217 = scmp.lt.s32.totalorder %s24, 0
        %s218 = scalar_select %p217, %s24, 0
        %s219 = smul.addr %s216, 4
        %s220 = sadd.s32 %s218, %s219
        %s221 = smul.addr %s220, 4
        %s222 = scalar_lea.vmem %s0, %s221
        %p223 = pneg %p54
        %p224 = pneg %p51
        %p225 = pneg %p75
        %p226 = pneg %p72
        %p227 = pneg %p96
        %p228 = pneg %p93
        %p229 = pneg %p117
        %p230 = pneg %p114
        %p231 = pneg %p138
        %p232 = pneg %p135
        %p233 = pneg %p166
        %p234 = pneg %p163
        %s235 = sand.u32 %s153, 1
        %s236 = scalar_lea.sflag [#allocation3], %s235
        %s237 = sand.u32 %s153, 1
        %s238 = smul.addr %s237, 32
        %s239 = scalar_lea.vmem [#allocation2], %s238
        %p240 = scmp.lt.s32.totalorder %s23, 1
        %s241 = scalar_select %p240, %s23, 1
        %p242 = scmp.lt.s32.totalorder %s24, 0
        %s243 = scalar_select %p242, %s24, 0
        %s244 = smul.addr %s241, 4
        %s245 = sadd.s32 %s243, %s244
        %s246 = smul.addr %s245, 4
        %s247 = scalar_lea.vmem %s0, %s246
        %v249 = vld [vmem:[%s247] sm:$0xf]
        %v250 = vld [vmem:[%s247 + $0x4] sm:$0xf]
        %v251 = vld [vmem:[%s247 + $0x8] sm:$0xf]
        %v252 = vld [vmem:[%s247 + $0xc] sm:$0xf]
        %v253 = vld [vmem:[%s1] sm:$0xf]
        %v254 = vld [vmem:[%s1 + $0x4] sm:$0xf]
        %v255 = vld [vmem:[%s1 + $0x8] sm:$0xf]
        %v256 = vld [vmem:[%s1 + $0xc] sm:$0xf]
        %v257 = vld [vmem:[%s1 + $0x10] sm:$0xf]
        %v258 = vld [vmem:[%s1 + $0x14] sm:$0xf]
        %v259 = vld [vmem:[%s1 + $0x18] sm:$0xf]
        %v260 = vld [vmem:[%s1 + $0x1c] sm:$0xf]
        %v261 = vld [vmem:[%s1 + $0x20] sm:$0xf]
        %v262 = vld [vmem:[%s1 + $0x24] sm:$0xf]
        %v263 = vld [vmem:[%s1 + $0x28] sm:$0xf]
        %v264 = vld [vmem:[%s1 + $0x2c] sm:$0xf]
        %v265 = vld [vmem:[%s1 + $0x30] sm:$0xf]
        %v266 = vld [vmem:[%s1 + $0x34] sm:$0xf]
        %v267 = vld [vmem:[%s1 + $0x38] sm:$0xf]
        %v268 = vld [vmem:[%s1 + $0x3c] sm:$0xf]
        %v269 = vld [vmem:[%s1 + $0x40] sm:$0xf]
        %v270 = vld [vmem:[%s1 + $0x44] sm:$0xf]
        %v271 = vld [vmem:[%s1 + $0x48] sm:$0xf]
        %v272 = vld [vmem:[%s1 + $0x4c] sm:$0xf]
        %v273 = vld [vmem:[%s1 + $0x50] sm:$0xf]
        %v274 = vld [vmem:[%s1 + $0x54] sm:$0xf]
        %v275 = vld [vmem:[%s1 + $0x58] sm:$0xf]
        %v276 = vld [vmem:[%s1 + $0x5c] sm:$0xf]
        %v277 = vld [vmem:[%s1 + $0x60] sm:$0xf]
        %v278 = vld [vmem:[%s1 + $0x64] sm:$0xf]
        %v279 = vld [vmem:[%s1 + $0x68] sm:$0xf]
        %v280 = vld [vmem:[%s1 + $0x6c] sm:$0xf]
        %v281 = vld [vmem:[%s1 + $0x70] sm:$0xf]
        %v282 = vld [vmem:[%s1 + $0x74] sm:$0xf]
        %v283 = vld [vmem:[%s1 + $0x78] sm:$0xf]
        %v284 = vld [vmem:[%s1 + $0x7c] sm:$0xf]
        %v285 = vld [vmem:[%s2] sm:$0xff]
        %v286 = vld [vmem:[%s2 + $0x8] sm:$0xff]
        %v287 = vld [vmem:[%s2 + $0x10] sm:$0xff]
        %v288 = vld [vmem:[%s2 + $0x18] sm:$0xff]
        %v289 = vld [vmem:[%s2 + $0x20] sm:$0xff]
        %v290 = vld [vmem:[%s2 + $0x28] sm:$0xff]
        %v291 = vld [vmem:[%s2 + $0x30] sm:$0xff]
        %v292 = vld [vmem:[%s2 + $0x38] sm:$0xff]
        %v293 = vld [vmem:[%s2 + $0x40] sm:$0xff]
        %v294 = vld [vmem:[%s2 + $0x48] sm:$0xff]
        %v295 = vld [vmem:[%s2 + $0x50] sm:$0xff]
        %v296 = vld [vmem:[%s2 + $0x58] sm:$0xff]
        %v297 = vld [vmem:[%s2 + $0x60] sm:$0xff]
        %v298 = vld [vmem:[%s2 + $0x68] sm:$0xff]
        %v299 = vld [vmem:[%s2 + $0x70] sm:$0xff]
        %v300 = vld [vmem:[%s2 + $0x78] sm:$0xff]
        %v301 = vld [vmem:[%s2 + $0x80] sm:$0xff]
        %v302 = vld [vmem:[%s2 + $0x88] sm:$0xff]
        %v303 = vld [vmem:[%s2 + $0x90] sm:$0xff]
        %v304 = vld [vmem:[%s2 + $0x98] sm:$0xff]
        %v305 = vld [vmem:[%s2 + $0xa0] sm:$0xff]
        %v306 = vld [vmem:[%s2 + $0xa8] sm:$0xff]
        %v307 = vld [vmem:[%s2 + $0xb0] sm:$0xff]
        %v308 = vld [vmem:[%s2 + $0xb8] sm:$0xff]
        %v309 = vld [vmem:[%s2 + $0xc0] sm:$0xff]
        %v310 = vld [vmem:[%s2 + $0xc8] sm:$0xff]
        %v311 = vld [vmem:[%s2 + $0xd0] sm:$0xff]
        %v312 = vld [vmem:[%s2 + $0xd8] sm:$0xff]
        %v313 = vld [vmem:[%s2 + $0xe0] sm:$0xff]
        %v314 = vld [vmem:[%s2 + $0xe8] sm:$0xff]
        %v315 = vld [vmem:[%s2 + $0xf0] sm:$0xff]
        %v316 = vld [vmem:[%s2 + $0xf8] sm:$0xff]
        %318 = vset.pattern.permute.xlu0 0
        %319 = vperm.xlu0 %318, %v285
        %v320 = vpop.permute.xlu0 %319
        %323 = vset.pattern.permute.xlu0 0
        %324 = vperm.xlu0 %323, %v286
        %v325 = vpop.permute.xlu0 %324
        %328 = vset.pattern.permute.xlu0 0
        %329 = vperm.xlu0 %328, %v287
        %v330 = vpop.permute.xlu0 %329
        %333 = vset.pattern.permute.xlu0 0
        %334 = vperm.xlu0 %333, %v288
        %v335 = vpop.permute.xlu0 %334
        %338 = vset.pattern.permute.xlu0 0
        %339 = vperm.xlu0 %338, %v289
        %v340 = vpop.permute.xlu0 %339
        %343 = vset.pattern.permute.xlu0 0
        %344 = vperm.xlu0 %343, %v290
        %v345 = vpop.permute.xlu0 %344
        %348 = vset.pattern.permute.xlu0 0
        %349 = vperm.xlu0 %348, %v291
        %v350 = vpop.permute.xlu0 %349
        %353 = vset.pattern.permute.xlu0 0
        %354 = vperm.xlu0 %353, %v292
        %v355 = vpop.permute.xlu0 %354
        %358 = vset.pattern.permute.xlu0 0
        %359 = vperm.xlu0 %358, %v293
        %v360 = vpop.permute.xlu0 %359
        %363 = vset.pattern.permute.xlu0 0
        %364 = vperm.xlu0 %363, %v294
        %v365 = vpop.permute.xlu0 %364
        %368 = vset.pattern.permute.xlu0 0
        %369 = vperm.xlu0 %368, %v295
        %v370 = vpop.permute.xlu0 %369
        %373 = vset.pattern.permute.xlu0 0
        %374 = vperm.xlu0 %373, %v296
        %v375 = vpop.permute.xlu0 %374
        %378 = vset.pattern.permute.xlu0 0
        %379 = vperm.xlu0 %378, %v297
        %v380 = vpop.permute.xlu0 %379
        %383 = vset.pattern.permute.xlu0 0
        %384 = vperm.xlu0 %383, %v298
        %v385 = vpop.permute.xlu0 %384
        %388 = vset.pattern.permute.xlu0 0
        %389 = vperm.xlu0 %388, %v299
        %v390 = vpop.permute.xlu0 %389
        %393 = vset.pattern.permute.xlu0 0
        %394 = vperm.xlu0 %393, %v300
        %v395 = vpop.permute.xlu0 %394
        %398 = vset.pattern.permute.xlu0 0
        %399 = vperm.xlu0 %398, %v301
        %v400 = vpop.permute.xlu0 %399
        %403 = vset.pattern.permute.xlu0 0
        %404 = vperm.xlu0 %403, %v302
        %v405 = vpop.permute.xlu0 %404
        %408 = vset.pattern.permute.xlu0 0
        %409 = vperm.xlu0 %408, %v303
        %v410 = vpop.permute.xlu0 %409
        %413 = vset.pattern.permute.xlu0 0
        %414 = vperm.xlu0 %413, %v304
        %v415 = vpop.permute.xlu0 %414
        %418 = vset.pattern.permute.xlu0 0
        %419 = vperm.xlu0 %418, %v305
        %v420 = vpop.permute.xlu0 %419
        %423 = vset.pattern.permute.xlu0 0
        %424 = vperm.xlu0 %423, %v306
        %v425 = vpop.permute.xlu0 %424
        %428 = vset.pattern.permute.xlu0 0
        %429 = vperm.xlu0 %428, %v307
        %v430 = vpop.permute.xlu0 %429
        %433 = vset.pattern.permute.xlu0 0
        %434 = vperm.xlu0 %433, %v308
        %v435 = vpop.permute.xlu0 %434
        %438 = vset.pattern.permute.xlu0 0
        %439 = vperm.xlu0 %438, %v309
        %v440 = vpop.permute.xlu0 %439
        %443 = vset.pattern.permute.xlu0 0
        %444 = vperm.xlu0 %443, %v310
        %v445 = vpop.permute.xlu0 %444
        %448 = vset.pattern.permute.xlu0 0
        %449 = vperm.xlu0 %448, %v311
        %v450 = vpop.permute.xlu0 %449
        %453 = vset.pattern.permute.xlu0 0
        %454 = vperm.xlu0 %453, %v312
        %v455 = vpop.permute.xlu0 %454
        %458 = vset.pattern.permute.xlu0 0
        %459 = vperm.xlu0 %458, %v313
        %v460 = vpop.permute.xlu0 %459
        %463 = vset.pattern.permute.xlu0 0
        %464 = vperm.xlu0 %463, %v314
        %v465 = vpop.permute.xlu0 %464
        %468 = vset.pattern.permute.xlu0 0
        %469 = vperm.xlu0 %468, %v315
        %v470 = vpop.permute.xlu0 %469
        %473 = vset.pattern.permute.xlu0 0
        %474 = vperm.xlu0 %473, %v316
        %v475 = vpop.permute.xlu0 %474
        %v509 = vunpack.c.l.b16 %v253
        %v510 = vunpack.c.l.b16 %v254
        %v511 = vunpack.c.l.b16 %v255
        %v512 = vunpack.c.l.b16 %v256
        %v513 = vunpack.c.l.b16 %v257
        %v514 = vunpack.c.l.b16 %v258
        %v515 = vunpack.c.l.b16 %v259
        %v516 = vunpack.c.l.b16 %v260
        %v517 = vunpack.c.l.b16 %v261
        %v518 = vunpack.c.l.b16 %v262
        %v519 = vunpack.c.l.b16 %v263
        %v520 = vunpack.c.l.b16 %v264
        %v521 = vunpack.c.l.b16 %v265
        %v522 = vunpack.c.l.b16 %v266
        %v523 = vunpack.c.l.b16 %v267
        %v524 = vunpack.c.l.b16 %v268
        %v525 = vunpack.c.l.b16 %v269
        %v526 = vunpack.c.l.b16 %v270
        %v527 = vunpack.c.l.b16 %v271
        %v528 = vunpack.c.l.b16 %v272
        %v529 = vunpack.c.l.b16 %v273
        %v530 = vunpack.c.l.b16 %v274
        %v531 = vunpack.c.l.b16 %v275
        %v532 = vunpack.c.l.b16 %v276
        %v533 = vunpack.c.l.b16 %v277
        %v534 = vunpack.c.l.b16 %v278
        %v535 = vunpack.c.l.b16 %v279
        %v536 = vunpack.c.l.b16 %v280
        %v537 = vunpack.c.l.b16 %v281
        %v538 = vunpack.c.l.b16 %v282
        %v539 = vunpack.c.l.b16 %v283
        %v540 = vunpack.c.l.b16 %v284
        %v541 = vpack.c.b16 %v510, %v509
        %v542 = vpack.c.b16 %v512, %v511
        %v543 = vpack.c.b16 %v514, %v513
        %v544 = vpack.c.b16 %v516, %v515
        %v545 = vpack.c.b16 %v518, %v517
        %v546 = vpack.c.b16 %v520, %v519
        %v547 = vpack.c.b16 %v522, %v521
        %v548 = vpack.c.b16 %v524, %v523
        %v549 = vpack.c.b16 %v526, %v525
        %v550 = vpack.c.b16 %v528, %v527
        %v551 = vpack.c.b16 %v530, %v529
        %v552 = vpack.c.b16 %v532, %v531
        %v553 = vpack.c.b16 %v534, %v533
        %v554 = vpack.c.b16 %v536, %v535
        %v555 = vpack.c.b16 %v538, %v537
        %v556 = vpack.c.b16 %v540, %v539
        %v561 = vunpack.c.l.b16 %v249
        %v562 = vunpack.c.l.b16 %v250
        %v563 = vunpack.c.l.b16 %v251
        %v564 = vunpack.c.l.b16 %v252
        %v565 = vpack.c.b16 %v562, %v561
        %v566 = vpack.c.b16 %v564, %v563
        %vm569 = vcmask 261120
        %v571 = vsel %vm569, %v541, 0
        %v574 = vsel %vm569, %v542, 0
        %v577 = vsel %vm569, %v543, 0
        %v580 = vsel %vm569, %v544, 0
        %v583 = vsel %vm569, %v545, 0
        %v586 = vsel %vm569, %v546, 0
        %v589 = vsel %vm569, %v547, 0
        %v592 = vsel %vm569, %v548, 0
        %v595 = vsel %vm569, %v549, 0
        %v598 = vsel %vm569, %v550, 0
        %v601 = vsel %vm569, %v551, 0
        %v604 = vsel %vm569, %v552, 0
        %v607 = vsel %vm569, %v553, 0
        %v610 = vsel %vm569, %v554, 0
        %v613 = vsel %vm569, %v555, 0
        %v616 = vsel %vm569, %v556, 0
        %618 = vmatprep.subr.bf16.mxu0 0
        %619 = vmatpush1.bf16.msra.mxu0 0
        %620 = vmatprep.subr.bf16.mxu0 0
        %621 = vmatpush1.bf16.msra.mxu0 0
        %622 = vmatprep.subr.bf16.mxu0 0
        %623 = vmatpush1.bf16.msra.mxu0 0
        %624 = vmatprep.subr.bf16.mxu0 0
        %625 = vmatpush1.bf16.msra.mxu0 0
        %626 = vmatprep.subr.bf16.mxu0 0
        %627 = vmatpush1.bf16.msra.mxu0 0
        %628 = vmatprep.subr.bf16.mxu0 0
        %629 = vmatpush1.bf16.msra.mxu0 0
        %630 = vmatprep.subr.bf16.mxu0 0
        %631 = vmatpush1.bf16.msra.mxu0 %v566
        %632 = vmatprep.subr.bf16.mxu0 0
        %633 = vmatpush1.bf16.msra.mxu0 %v565
        %634 = vmatprep.subr.bf16.mxu0 0
        %635 = vmatpush2.bf16.msra.mxu0 0
        %636 = vmatprep.subr.bf16.mxu0 0
        %637 = vmatpush2.bf16.msra.mxu0 0
        %638 = vmatprep.subr.bf16.mxu0 0
        %639 = vmatpush2.bf16.msra.mxu0 0
        %640 = vmatprep.subr.bf16.mxu0 0
        %641 = vmatpush2.bf16.msra.mxu0 0
        %642 = vmatprep.subr.bf16.mxu0 0
        %643 = vmatpush2.bf16.msra.mxu0 0
        %644 = vmatprep.subr.bf16.mxu0 0
        %645 = vmatpush2.bf16.msra.mxu0 0
        %646 = vmatprep.subr.bf16.mxu0 0
        %647 = vmatpush2.bf16.msra.mxu0 0
        %648 = vmatprep.subr.bf16.mxu0 0
        %649 = vmatpush2.bf16.msra.mxu0 0
        %650 = vmatprep.mubr.bf16.mxu0 0
        %651 = vmatmul.mubr.bf16.gmra.mxu0 %v571
        %v652 = vpop.f32.mrf.mxu0
        %v653 = vadd.f32 %v320, %v652
        %v654 = vpop.f32.mrf.mxu0
        %v655 = vpop.f32.mrf.mxu0
        %v656 = vadd.f32 %v325, %v655
        %v657 = vpop.f32.mrf.mxu0
        %658 = vmatprep.mubr.bf16.mxu0 0
        %659 = vmatmul.mubr.bf16.gmra.mxu0 %v574
        %v660 = vpop.f32.mrf.mxu0
        %v661 = vadd.f32 %v330, %v660
        %v662 = vpop.f32.mrf.mxu0
        %v663 = vpop.f32.mrf.mxu0
        %v664 = vadd.f32 %v335, %v663
        %v665 = vpop.f32.mrf.mxu0
        %666 = vmatprep.mubr.bf16.mxu0 0
        %667 = vmatmul.mubr.bf16.gmra.mxu0 %v577
        %v668 = vpop.f32.mrf.mxu0
        %v669 = vadd.f32 %v340, %v668
        %v670 = vpop.f32.mrf.mxu0
        %v671 = vpop.f32.mrf.mxu0
        %v672 = vadd.f32 %v345, %v671
        %v673 = vpop.f32.mrf.mxu0
        %674 = vmatprep.mubr.bf16.mxu0 0
        %675 = vmatmul.mubr.bf16.gmra.mxu0 %v580
        %v676 = vpop.f32.mrf.mxu0
        %v677 = vadd.f32 %v350, %v676
        %v678 = vpop.f32.mrf.mxu0
        %v679 = vpop.f32.mrf.mxu0
        %v680 = vadd.f32 %v355, %v679
        %v681 = vpop.f32.mrf.mxu0
        %682 = vmatprep.mubr.bf16.mxu0 0
        %683 = vmatmul.mubr.bf16.gmra.mxu0 %v583
        %v684 = vpop.f32.mrf.mxu0
        %v685 = vadd.f32 %v360, %v684
        %v686 = vpop.f32.mrf.mxu0
        %v687 = vpop.f32.mrf.mxu0
        %v688 = vadd.f32 %v365, %v687
        %v689 = vpop.f32.mrf.mxu0
        %690 = vmatprep.mubr.bf16.mxu0 0
        %691 = vmatmul.mubr.bf16.gmra.mxu0 %v586
        %v692 = vpop.f32.mrf.mxu0
        %v693 = vadd.f32 %v370, %v692
        %v694 = vpop.f32.mrf.mxu0
        %v695 = vpop.f32.mrf.mxu0
        %v696 = vadd.f32 %v375, %v695
        %v697 = vpop.f32.mrf.mxu0
        %698 = vmatprep.mubr.bf16.mxu0 0
        %699 = vmatmul.mubr.bf16.gmra.mxu0 %v589
        %v700 = vpop.f32.mrf.mxu0
        %v701 = vadd.f32 %v380, %v700
        %v702 = vpop.f32.mrf.mxu0
        %v703 = vpop.f32.mrf.mxu0
        %v704 = vadd.f32 %v385, %v703
        %v705 = vpop.f32.mrf.mxu0
        %706 = vmatprep.mubr.bf16.mxu0 0
        %707 = vmatmul.mubr.bf16.gmra.mxu0 %v592
        %v708 = vpop.f32.mrf.mxu0
        %v709 = vadd.f32 %v390, %v708
        %v710 = vpop.f32.mrf.mxu0
        %v711 = vpop.f32.mrf.mxu0
        %v712 = vadd.f32 %v395, %v711
        %v713 = vpop.f32.mrf.mxu0
        %714 = vmatprep.mubr.bf16.mxu0 0
        %715 = vmatmul.mubr.bf16.gmra.mxu0 %v595
        %v716 = vpop.f32.mrf.mxu0
        %v717 = vadd.f32 %v400, %v716
        %v718 = vpop.f32.mrf.mxu0
        %v719 = vpop.f32.mrf.mxu0
        %v720 = vadd.f32 %v405, %v719
        %v721 = vpop.f32.mrf.mxu0
        %722 = vmatprep.mubr.bf16.mxu0 0
        %723 = vmatmul.mubr.bf16.gmra.mxu0 %v598
        %v724 = vpop.f32.mrf.mxu0
        %v725 = vadd.f32 %v410, %v724
        %v726 = vpop.f32.mrf.mxu0
        %v727 = vpop.f32.mrf.mxu0
        %v728 = vadd.f32 %v415, %v727
        %v729 = vpop.f32.mrf.mxu0
        %730 = vmatprep.mubr.bf16.mxu0 0
        %731 = vmatmul.mubr.bf16.gmra.mxu0 %v601
        %v732 = vpop.f32.mrf.mxu0
        %v733 = vadd.f32 %v420, %v732
        %v734 = vpop.f32.mrf.mxu0
        %v735 = vpop.f32.mrf.mxu0
        %v736 = vadd.f32 %v425, %v735
        %v737 = vpop.f32.mrf.mxu0
        %738 = vmatprep.mubr.bf16.mxu0 0
        %739 = vmatmul.mubr.bf16.gmra.mxu0 %v604
        %v740 = vpop.f32.mrf.mxu0
        %v741 = vadd.f32 %v430, %v740
        %v742 = vpop.f32.mrf.mxu0
        %v743 = vpop.f32.mrf.mxu0
        %v744 = vadd.f32 %v435, %v743
        %v745 = vpop.f32.mrf.mxu0
        %746 = vmatprep.mubr.bf16.mxu0 0
        %747 = vmatmul.mubr.bf16.gmra.mxu0 %v607
        %v748 = vpop.f32.mrf.mxu0
        %v749 = vadd.f32 %v440, %v748
        %v750 = vpop.f32.mrf.mxu0
        %v751 = vpop.f32.mrf.mxu0
        %v752 = vadd.f32 %v445, %v751
        %v753 = vpop.f32.mrf.mxu0
        %754 = vmatprep.mubr.bf16.mxu0 0
        %755 = vmatmul.mubr.bf16.gmra.mxu0 %v610
        %v756 = vpop.f32.mrf.mxu0
        %v757 = vadd.f32 %v450, %v756
        %v758 = vpop.f32.mrf.mxu0
        %v759 = vpop.f32.mrf.mxu0
        %v760 = vadd.f32 %v455, %v759
        %v761 = vpop.f32.mrf.mxu0
        %762 = vmatprep.mubr.bf16.mxu0 0
        %763 = vmatmul.mubr.bf16.gmra.mxu0 %v613
        %v764 = vpop.f32.mrf.mxu0
        %v765 = vadd.f32 %v460, %v764
        %v766 = vpop.f32.mrf.mxu0
        %v767 = vpop.f32.mrf.mxu0
        %v768 = vadd.f32 %v465, %v767
        %v769 = vpop.f32.mrf.mxu0
        %770 = vmatprep.mubr.bf16.mxu0 0
        %771 = vmatmul.mubr.bf16.gmra.mxu0 %v616
        %v772 = vpop.f32.mrf.mxu0
        %v773 = vadd.f32 %v470, %v772
        %v774 = vpop.f32.mrf.mxu0
        %v775 = vpop.f32.mrf.mxu0
        %v776 = vadd.f32 %v475, %v775
        %v777 = vpop.f32.mrf.mxu0
        %778 = vdwg.mxu0
        %v779 = vmax.f32 %v653, 0.0
        %v780 = vmax.f32 %v656, 0.0
        %v781 = vmax.f32 %v661, 0.0
        %v782 = vmax.f32 %v664, 0.0
        %v783 = vmax.f32 %v669, 0.0
        %v784 = vmax.f32 %v672, 0.0
        %v785 = vmax.f32 %v677, 0.0
        %v786 = vmax.f32 %v680, 0.0
        %v787 = vmax.f32 %v685, 0.0
        %v788 = vmax.f32 %v688, 0.0
        %v789 = vmax.f32 %v693, 0.0
        %v790 = vmax.f32 %v696, 0.0
        %v791 = vmax.f32 %v701, 0.0
        %v792 = vmax.f32 %v704, 0.0
        %v793 = vmax.f32 %v709, 0.0
        %v794 = vmax.f32 %v712, 0.0
        %v795 = vmax.f32 %v717, 0.0
        %v796 = vmax.f32 %v720, 0.0
        %v797 = vmax.f32 %v725, 0.0
        %v798 = vmax.f32 %v728, 0.0
        %v799 = vmax.f32 %v733, 0.0
        %v800 = vmax.f32 %v736, 0.0
        %v801 = vmax.f32 %v741, 0.0
        %v802 = vmax.f32 %v744, 0.0
        %v803 = vmax.f32 %v749, 0.0
        %v804 = vmax.f32 %v752, 0.0
        %v805 = vmax.f32 %v757, 0.0
        %v806 = vmax.f32 %v760, 0.0
        %v807 = vmax.f32 %v765, 0.0
        %v808 = vmax.f32 %v768, 0.0
        %v809 = vmax.f32 %v773, 0.0
        %v810 = vmax.f32 %v776, 0.0
        %v811 = vld [vmem:[%s3] sm:$0xff]
        %v812 = vld [vmem:[%s3 + $0x8] sm:$0xff]
        %v813 = vld [vmem:[%s3 + $0x10] sm:$0xff]
        %v814 = vld [vmem:[%s3 + $0x18] sm:$0xff]
        %v815 = vpack.c.bf16 %v780, %v779
        %v816 = vpack.c.bf16 %v782, %v781
        %v817 = vpack.c.bf16 %v784, %v783
        %v818 = vpack.c.bf16 %v786, %v785
        %v819 = vpack.c.bf16 %v788, %v787
        %v820 = vpack.c.bf16 %v790, %v789
        %v821 = vpack.c.bf16 %v792, %v791
        %v822 = vpack.c.bf16 %v794, %v793
        %v823 = vpack.c.bf16 %v796, %v795
        %v824 = vpack.c.bf16 %v798, %v797
        %v825 = vpack.c.bf16 %v800, %v799
        %v826 = vpack.c.bf16 %v802, %v801
        %v827 = vpack.c.bf16 %v804, %v803
        %v828 = vpack.c.bf16 %v806, %v805
        %v829 = vpack.c.bf16 %v808, %v807
        %v830 = vpack.c.bf16 %v810, %v809
        %v831 = vld [vmem:[%s4] sm:$0xff]
        %v832 = vld [vmem:[%s4 + $0x8] sm:$0xff]
        %v833 = vld [vmem:[%s4 + $0x10] sm:$0xff]
        %v834 = vld [vmem:[%s4 + $0x18] sm:$0xff]
        %836 = vset.pattern.permute.xlu0 0
        %837 = vperm.xlu0 %836, %v831
        %v838 = vpop.permute.xlu0 %837
        %841 = vset.pattern.permute.xlu0 0
        %842 = vperm.xlu0 %841, %v832
        %v843 = vpop.permute.xlu0 %842
        %846 = vset.pattern.permute.xlu0 0
        %847 = vperm.xlu0 %846, %v833
        %v848 = vpop.permute.xlu0 %847
        %851 = vset.pattern.permute.xlu0 0
        %852 = vperm.xlu0 %851, %v834
        %v853 = vpop.permute.xlu0 %852
        %v859 = vunpack.c.l.b16 %v811
        %v860 = vunpack.c.h.b16 %v811
        %v861 = vunpack.c.l.b16 %v812
        %v862 = vunpack.c.h.b16 %v812
        %v863 = vunpack.c.l.b16 %v813
        %v864 = vunpack.c.h.b16 %v813
        %v865 = vunpack.c.l.b16 %v814
        %v866 = vunpack.c.h.b16 %v814
        %v867 = vpack.c.b16 %v861, %v859
        %v868 = vpack.c.b16 %v862, %v860
        %v869 = vpack.c.b16 %v865, %v863
        %v870 = vpack.c.b16 %v866, %v864
        %875 = vmatprep.subr.bf16.mxu0 0
        %876 = vmatpush1.bf16.msra.mxu0 %v822
        %877 = vmatprep.subr.bf16.mxu0 0
        %878 = vmatpush1.bf16.msra.mxu0 %v821
        %879 = vmatprep.subr.bf16.mxu0 0
        %880 = vmatpush1.bf16.msra.mxu0 %v820
        %881 = vmatprep.subr.bf16.mxu0 0
        %882 = vmatpush1.bf16.msra.mxu0 %v819
        %883 = vmatprep.subr.bf16.mxu0 0
        %884 = vmatpush1.bf16.msra.mxu0 %v818
        %885 = vmatprep.subr.bf16.mxu0 0
        %886 = vmatpush1.bf16.msra.mxu0 %v817
        %887 = vmatprep.subr.bf16.mxu0 0
        %888 = vmatpush1.bf16.msra.mxu0 %v816
        %889 = vmatprep.subr.bf16.mxu0 0
        %890 = vmatpush1.bf16.msra.mxu0 %v815
        %891 = vmatprep.subr.bf16.mxu0 0
        %892 = vmatpush2.bf16.msra.mxu0 %v830
        %893 = vmatprep.subr.bf16.mxu0 0
        %894 = vmatpush2.bf16.msra.mxu0 %v829
        %895 = vmatprep.subr.bf16.mxu0 0
        %896 = vmatpush2.bf16.msra.mxu0 %v828
        %897 = vmatprep.subr.bf16.mxu0 0
        %898 = vmatpush2.bf16.msra.mxu0 %v827
        %899 = vmatprep.subr.bf16.mxu0 0
        %900 = vmatpush2.bf16.msra.mxu0 %v826
        %901 = vmatprep.subr.bf16.mxu0 0
        %902 = vmatpush2.bf16.msra.mxu0 %v825
        %903 = vmatprep.subr.bf16.mxu0 0
        %904 = vmatpush2.bf16.msra.mxu0 %v824
        %905 = vmatprep.subr.bf16.mxu0 0
        %906 = vmatpush2.bf16.msra.mxu0 %v823
        %907 = vmatprep.mubr.bf16.mxu0 %v868
        %908 = vmatmul.mubr.bf16.gmra.mxu0 %v867
        %v909 = vpop.f32.mrf.mxu0
        %v910 = vadd.f32 %v838, %v909
        %v911 = vpop.f32.mrf.mxu0
        %v912 = vpop.f32.mrf.mxu0
        %v913 = vadd.f32 %v843, %v912
        %v914 = vpop.f32.mrf.mxu0
        %915 = vmatprep.mubr.bf16.mxu0 %v870
        %916 = vmatmul.mubr.bf16.gmra.mxu0 %v869
        %v917 = vpop.f32.mrf.mxu0
        %v918 = vadd.f32 %v848, %v917
        %v919 = vpop.f32.mrf.mxu0
        %v920 = vpop.f32.mrf.mxu0
        %v921 = vadd.f32 %v853, %v920
        %v922 = vpop.f32.mrf.mxu0
        %923 = vdwg.mxu0
        %924 = vst [vmem:[%s239] sm:$0xff] %v910
        %925 = vst [vmem:[%s239 + $0x8] sm:$0xff] %v913
        %926 = vst [vmem:[%s239 + $0x10] sm:$0xff] %v918
        %927 = vst [vmem:[%s239 + $0x18] sm:$0xff] %v921
        %s928 = sand.u32 %s153, 1
        %s929 = scalar_lea.sflag [#allocation3], %s928
        %s930 = sand.u32 %s153, 1
        %s931 = smul.addr %s930, 32
        %s932 = scalar_lea.vmem [#allocation2], %s931
        // Predicated region
        $region41: #{conv_neural_net_1d_forward.1} parent=39 // pred_check
          %p933 = pneg %p163
        $region42: #{conv_neural_net_1d_forward.1} parent=39 // pred_check_branch
          %935 = sbr.rel (%p933) target = $region44
        $region43: #{conv_neural_net_1d_forward.1} parent=39 // pred_region
          %s937 = ssub.s32 512, 512
          %938 = vsyncadd %s929, %s937
          %s939 = smul.addr %s23, 4
          %s940 = sadd.s32 %s24, %s939
          %s941 = smul.addr %s940, 128
          %s942 = scalar_lea.hbm %s5, %s941
          %s943 = sshll.u32 %s932, 4
          %s944 = int_to_ptr.vmem [resolvable:$true] %s943
          %949 = dma.vmem_to_hbm [thread:$0]  %s944, 512, %s942, %s929, 128, 128, 8
        $region44: #{conv_neural_net_1d_forward.1} parent=39 // pred_fallthru
          _
      $region40: #{conv_neural_net_1d_forward.1} parent=5 // pred_fallthru
        _
      %p950 = scmp.le.s32.totalorder 2, %s14
      // Predicated region
      $region45: #{conv_neural_net_1d_forward.1} parent=5 // pred_check
        %p951 = pneg %p950
      $region46: #{conv_neural_net_1d_forward.1} parent=5 // pred_check_branch
        %953 = sbr.rel (%p951) target = $region48
      $region47: #{conv_neural_net_1d_forward.1} parent=5 // pred_region
        %s954 = ssub.s32 %s14, 2
        // Predicated region
        $region49: #{conv_neural_net_1d_forward.1} parent=47 // pred_check
          %p955 = pneg %p169
        $region50: #{conv_neural_net_1d_forward.1} parent=47 // pred_check_branch
          %957 = sbr.rel (%p955) target = $region52
        $region51: #{conv_neural_net_1d_forward.1} parent=47 // pred_region
          %s958 = sand.u32 %s154, 1
          %s959 = scalar_lea.sflag [#allocation3], %s958
          %s960 = sand.u32 %s154, 1
          %s961 = smul.addr %s960, 32
          %s962 = scalar_lea.vmem [#allocation2], %s961
          %963 = dma.done %s959, 512
        $region52: #{conv_neural_net_1d_forward.1} parent=47 // pred_fallthru
          _
      $region48: #{conv_neural_net_1d_forward.1} parent=5 // pred_fallthru
        _
    $region6: #{conv_neural_net_1d_forward.1} parent=1 // loop_footer
      %s18 = sadd.s32 1, %s14
    $region7: #{conv_neural_net_1d_forward.1} parent=1 // loop_footer_branch
      %13 = sbr.rel target = $region3
    $region8: #{conv_neural_net_1d_forward.1} parent=1 // loop_exit
      _
    %964 = vsyncpa [#allocation3], 1
    %s965 = scalar_lea.sflag [#allocation3], 1
    %966 = vsyncpa %s965, 1

</llo_original>
